<compile_context>
chip_gen: v7x
topology: tpu7x:2x2x1
jax: 0.10.0
libtpu: 0.0.40
codegen_flags: <defaults>
</compile_context>

<pallas_src>
import math

import jax
import jax.numpy as jnp
from jax.experimental import pallas as pl
from jax.experimental.pallas import tpu as pltpu

_LANE = 128
_SUB = 8
_TARGET_BLOCK_BYTES = 4 * 1024 * 1024  # ~4 MiB x-block (dtype-aware row count)


def _drop_path_kernel(s_ref, x_ref, o_ref):
    # s_ref: (tile_r, 1) per-row scale (0 or 1/keep_prob) in the input dtype.
    # x_ref/o_ref: (tile_r, 128) lane-dense tiles. Pure VPU splat multiply.
    o_ref[...] = x_ref[...] * s_ref[...]


def _round_up(v, m):
    return ((v + m - 1) // m) * m


def drop_path_pallas(x, *, drop_prob=0.0, training=False, key=None, seed=0):
    """Pallas DropPath. x: (B, ...) float array (any non-batch shape).

    Pass a distinct `key` per layer / training step; the `seed` fallback is
    only for convenience and will reuse the same mask across calls.
    """
    if drop_prob == 0.0 or not training:
        return x
    if drop_prob >= 1.0:
        # keep_prob == 0: every sample is dropped (PyTorch would emit NaN/inf).
        return jnp.zeros_like(x)
    keep_prob = 1.0 - drop_prob
    if key is None:
        key = jax.random.PRNGKey(seed)

    orig_shape = x.shape
    B = x.shape[0]
    N = int(math.prod(x.shape[1:]))

    # --- per-sample Bernoulli(keep_prob), matching floor(keep_prob + U[0,1)) ---
    u = jax.random.uniform(key, (B,), dtype=jnp.float32)
    keep = jnp.floor(jnp.float32(keep_prob) + u)            # 1.0 w.p. keep_prob
    scale_b = (keep * jnp.float32(1.0 / keep_prob)).astype(x.dtype)   # (B,)

    # --- lane-dense layout flattened across the batch ---
    rows = pl.cdiv(N, _LANE)            # rows per sample
    n_pad = rows * _LANE                # per-sample padded length (== N usually)
    total_rows = B * rows

    x_flat = x.reshape(B, N)
    if n_pad != N:                      # only pay pad/slice when N % 128 != 0
        x_flat = jnp.pad(x_flat, ((0, 0), (0, n_pad - N)))
    x2 = x_flat.reshape(total_rows, _LANE)

    # per-row scale, ~itemsize bytes per 128-lane row of x
    scale_rows = jnp.repeat(scale_b, rows).reshape(total_rows, 1)

    # --- tile sizing: byte-based, dtype-aware, >= 2 blocks when possible ---
    itemsize = jnp.dtype(x.dtype).itemsize
    tile_r_cap = max(_SUB, (_TARGET_BLOCK_BYTES // (_LANE * itemsize)) // _SUB * _SUB)
    if total_rows <= _SUB:
        tile_r = total_rows                         # single full-extent block
    else:
        half_rows = _round_up(pl.cdiv(total_rows, 2), _SUB)
        tile_r = max(_SUB, min(tile_r_cap, half_rows))
    num_blocks = pl.cdiv(total_rows, tile_r)        # ragged last block is masked

    out = pl.pallas_call(
        _drop_path_kernel,
        out_shape=jax.ShapeDtypeStruct((total_rows, _LANE), x.dtype),
        grid=(num_blocks,),
        in_specs=[
            pl.BlockSpec((tile_r, 1), lambda r: (r, 0)),
            pl.BlockSpec((tile_r, _LANE), lambda r: (r, 0)),
        ],
        out_specs=pl.BlockSpec((tile_r, _LANE), lambda r: (r, 0)),
        compiler_params=pltpu.CompilerParams(
            dimension_semantics=("parallel",),
            vmem_limit_bytes=32 * 1024 * 1024,
        ),
        cost_estimate=pl.CostEstimate(
            flops=total_rows * _LANE,
            transcendentals=0,
            bytes_accessed=2 * total_rows * _LANE * itemsize,
        ),
    )(scale_rows, x2)

    if n_pad != N:
        out = out.reshape(B, n_pad)[:, :N]
    return out.reshape(orig_shape)


def _check_per_sample(y, x, keep_prob, rtol=1e-5, atol=1e-6):
    for b in range(x.shape[0]):
        yb, xb = y[b], x[b]
        dropped = bool(jnp.allclose(yb, 0.0))
        kept = bool(jnp.allclose(yb, xb / keep_prob, rtol=rtol, atol=atol))
        assert dropped or kept, "per-sample output must be 0 or x/keep_prob"


if __name__ == "__main__":
    root = jax.random.PRNGKey(0)
    kx, kmask = jax.random.split(root)

    # Case 1: canonical shape, N % 128 == 0 (no pad/slice), 2 row blocks.
    x = jax.random.normal(kx, (2, 4, 16, 16), dtype=jnp.float32)
    drop_prob = 0.5
    keep_prob = 1.0 - drop_prob

    y_eval = drop_path_pallas(x, drop_prob=drop_prob, training=False, key=kmask)
    jax.block_until_ready(y_eval)
    assert jnp.array_equal(y_eval, x)

    y = drop_path_pallas(x, drop_prob=drop_prob, training=True, key=kmask)
    jax.block_until_ready(y)
    _check_per_sample(y, x, keep_prob, rtol=1e-6)

    # Case 2: non-128-multiple per-sample size -> exercises the pad/slice path.
    x2 = jax.random.normal(jax.random.PRNGKey(1), (2, 3, 7, 5), dtype=jnp.float32)
    kp2 = 0.7
    y2 = drop_path_pallas(x2, drop_prob=1.0 - kp2, training=True,
                          key=jax.random.PRNGKey(3))
    jax.block_until_ready(y2)
    assert y2.shape == x2.shape
    _check_per_sample(y2, x2, kp2)

    # Case 3: multiple rows per sample, samples straddle a ragged block boundary.
    x3 = jax.random.normal(jax.random.PRNGKey(2), (4, 3, 128), dtype=jnp.float32)
    kp3 = 0.8
    y3 = drop_path_pallas(x3, drop_prob=1.0 - kp3, training=True,
                          key=jax.random.PRNGKey(4))
    jax.block_until_ready(y3)
    assert y3.shape == x3.shape
    _check_per_sample(y3, x3, kp3)

    print("KERNEL_OK")
</pallas_src>

<mosaic_0001>
module attributes {stable_mosaic.version = 11 : i64} {
  func.func @_drop_path_kernel(%arg0: i32, %arg1: memref<8x1xf32, #tpu.memory_space<vmem>>, %arg2: memref<8x128xf32, #tpu.memory_space<vmem>>, %arg3: memref<8x128xf32, #tpu.memory_space<vmem>>) attributes {dimension_semantics = [#tpu.dimension_semantics<parallel>], iteration_bounds = array<i64: 2>, scalar_prefetch = 0 : i64, scratch_operands = 0 : i64, tpu.core_type = #tpu.core_type<tc>, window_params = [{transform_indices = @transform_0, window_bounds = array<i64: 8, 1>}, {transform_indices = @transform_1, window_bounds = array<i64: 8, 128>}, {transform_indices = @transform_2, window_bounds = array<i64: 8, 128>}]} {
    %c0 = arith.constant 0 : index
    %c0_0 = arith.constant 0 : index
    %0 = vector.load %arg2[%c0, %c0_0] : memref<8x128xf32, #tpu.memory_space<vmem>>, vector<8x128xf32>
    %c0_1 = arith.constant 0 : index
    %c0_2 = arith.constant 0 : index
    %1 = vector.load %arg1[%c0_1, %c0_2] : memref<8x1xf32, #tpu.memory_space<vmem>>, vector<8x1xf32>
    %2 = vector.broadcast %1 : vector<8x1xf32> to vector<8x128xf32>
    %3 = arith.mulf %0, %2 : vector<8x128xf32>
    %c0_3 = arith.constant 0 : index
    %c0_4 = arith.constant 0 : index
    %4 = vector.load %arg3[%c0_3, %c0_4] : memref<8x128xf32, #tpu.memory_space<vmem>>, vector<8x128xf32>
    tpu.vector_store %arg3[%c0_3, %c0_4], %3 {strides = array<i32>} : memref<8x128xf32, #tpu.memory_space<vmem>>, vector<8x128xf32>,
    return
  }
  func.func @transform_0(%arg0: i32) -> (i32, i32) {
    %c0_i32 = arith.constant 0 : i32
    %c0_i32_0 = arith.constant 0 : i32
    return %arg0, %c0_i32 : i32, i32
  }
  func.func @transform_1(%arg0: i32) -> (i32, i32) {
    %c0_i32 = arith.constant 0 : i32
    %c0_i32_0 = arith.constant 0 : i32
    return %arg0, %c0_i32 : i32, i32
  }
  func.func @transform_2(%arg0: i32) -> (i32, i32) {
    %c0_i32 = arith.constant 0 : i32
    %c0_i32_0 = arith.constant 0 : i32
    return %arg0, %c0_i32 : i32, i32
  }
}

</mosaic_0001>

<llo_original>
// kernel: tpu_custom_call.1
$region0: #{tpu_custom_call.1}
  #allocation0 [shape = 'u32[]', space=smem, size = 0x4, offset = 0x4, fixed_abs, tag = 'smem constant byte address 0x4 - core index']
  #allocation1 [shape = 'u32[144,128]{1,0:T(1,128)}', space=vmem, size = 0x12000, scoped, tag = 'internal scratch']
  %s0 = inlined_call_operand.vmem [shape: f32[16,1], index: 0, kind: input, shape index: {}]
  %s1 = inlined_call_operand.vmem [shape: f32[16,128], index: 1, kind: input, shape index: {}]
  %s2 = inlined_call_operand.hbm [shape: f32[16,128], index: 2, kind: output, shape index: {}]
  %s3 = sld [smem:[#allocation0]]
  $region41: #{tpu_custom_call.1} parent=0
    _
  %s5 = ssub.s32 1, %s3
  %s6 = scalar_select 0, %s5, %s3
  $region1: #{tpu_custom_call.1} parent=0
    #allocation2 [shape = 'u8[8192]{0}', space=vmem, size = 0x2000, scoped, tag = 'output window, operand 0']
    #allocation3 [shape = 's32[2]{0}', space=sflag, size = 0x8, scoped, tag = 'scoped memory for tpu_custom_call.1']
    %7 = vsyncpa [#allocation3], 0
    %s8 = scalar_lea.sflag [#allocation3], 1
    %9 = vsyncpa %s8, 0
    loop: start=0, step=1, limit=4
    $region2: #{tpu_custom_call.1} parent=1 // loop_pre_header
      _
    $region3: #{tpu_custom_call.1} parent=1 // loop_header
      %s11 = sphi 0, %s15
      %p12 = scmp.ge.s32.totalorder %s11, 4
      %s21 = sphi 0, %s23
      %s24 = sphi 0, %s21
      %s25 = sphi 0, %s24
      %s41 = sphi 0, %s25
      %s47 = sphi 0, %s49
      %s50 = sphi 0, %s47
      %s51 = sphi 0, %s50
      %s67 = sphi 0, %s51
      %s73 = sphi 0, %s75
      %s76 = sphi 0, %s73
      %s77 = sphi 0, %s76
      %s93 = sphi 0, %s77
    $region4: #{tpu_custom_call.1} parent=1 // loop_header_branch
      %14 = sbr.rel (%p12) target = $region8
    $region5: #{tpu_custom_call.1} parent=1 // loop_body
      %s16 = ssub.s32 %s11, 1
      %s17 = ssub.s32 %s11, 2
      %s18 = sadd.s32 %s11, 1
      %s19 = ssub.s32 %s11, %s18
      %p20 = scmp.eq.s32.totalorder %s19, 0
      %s22 = sadd.s32 %s21, 1
      %s23 = scalar_select %p20, %s21, %s22
      %p26 = pneg %p20
      %p27 = scmp.eq.s32.totalorder %s11, 1
      %p28 = por %p26, %p27
      %p29 = scmp.ne.s32.totalorder %s21, %s24
      %p30 = scmp.eq.s32.totalorder %s11, 0
      %p31 = por %p29, %p30
      %p32 = scmp.ne.s32.totalorder %s21, %s24
      %p33 = scmp.eq.s32.totalorder %s16, 1
      %p34 = por %p32, %p33
      %p35 = scmp.ne.s32.totalorder %s24, %s25
      %p36 = scmp.eq.s32.totalorder %s16, 0
      %p37 = por %p35, %p36
      %p38 = scmp.ne.s32.totalorder %s24, %s25
      %p39 = scmp.eq.s32.totalorder %s17, 1
      %p40 = por %p38, %p39
      %p42 = scmp.ne.s32.totalorder %s25, %s41
      %p43 = scmp.eq.s32.totalorder %s17, 0
      %p44 = por %p42, %p43
      %s45 = ssub.s32 %s11, %s18
      %p46 = scmp.eq.s32.totalorder %s45, 0
      %s48 = sadd.s32 %s47, 1
      %s49 = scalar_select %p46, %s47, %s48
      %p52 = pneg %p46
      %p53 = scmp.eq.s32.totalorder %s11, 1
      %p54 = por %p52, %p53
      %p55 = scmp.ne.s32.totalorder %s47, %s50
      %p56 = scmp.eq.s32.totalorder %s11, 0
      %p57 = por %p55, %p56
      %p58 = scmp.ne.s32.totalorder %s47, %s50
      %p59 = scmp.eq.s32.totalorder %s16, 1
      %p60 = por %p58, %p59
      %p61 = scmp.ne.s32.totalorder %s50, %s51
      %p62 = scmp.eq.s32.totalorder %s16, 0
      %p63 = por %p61, %p62
      %p64 = scmp.ne.s32.totalorder %s50, %s51
      %p65 = scmp.eq.s32.totalorder %s17, 1
      %p66 = por %p64, %p65
      %p68 = scmp.ne.s32.totalorder %s51, %s67
      %p69 = scmp.eq.s32.totalorder %s17, 0
      %p70 = por %p68, %p69
      %s71 = ssub.s32 %s11, %s18
      %p72 = scmp.eq.s32.totalorder %s71, 0
      %s74 = sadd.s32 %s73, 1
      %s75 = scalar_select %p72, %s73, %s74
      %p78 = pneg %p72
      %p79 = scmp.eq.s32.totalorder %s11, 1
      %p80 = por %p78, %p79
      %p81 = scmp.ne.s32.totalorder %s73, %s76
      %p82 = scmp.eq.s32.totalorder %s11, 0
      %p83 = por %p81, %p82
      %p84 = scmp.ne.s32.totalorder %s73, %s76
      %p85 = scmp.eq.s32.totalorder %s16, 1
      %p86 = por %p84, %p85
      %p87 = scmp.ne.s32.totalorder %s76, %s77
      %p88 = scmp.eq.s32.totalorder %s16, 0
      %p89 = por %p87, %p88
      %p90 = scmp.ne.s32.totalorder %s76, %s77
      %p91 = scmp.eq.s32.totalorder %s17, 1
      %p92 = por %p90, %p91
      %p94 = scmp.ne.s32.totalorder %s77, %s93
      %p95 = scmp.eq.s32.totalorder %s17, 0
      %p96 = por %p94, %p95
      %p97 = scmp.le.s32.totalorder 1, %s11
      %p98 = scmp.lt.s32.totalorder %s11, 3
      %p99 = pnand %p97, %p98
      %p100 = pneg %p99
      // Predicated region
      $region9: #{tpu_custom_call.1} parent=5 // pred_check
        _
      $region10: #{tpu_custom_call.1} parent=5 // pred_check_branch
        %102 = sbr.rel (%p99) target = $region12
      $region11: #{tpu_custom_call.1} parent=5 // pred_region
        %s103 = ssub.s32 %s11, 1
      $region12: #{tpu_custom_call.1} parent=5 // pred_fallthru
        _
      %p104 = scmp.lt.s32.totalorder %s11, 2
      // Predicated region
      $region13: #{tpu_custom_call.1} parent=5 // pred_check
        %p105 = pneg %p104
      $region14: #{tpu_custom_call.1} parent=5 // pred_check_branch
        %107 = sbr.rel (%p105) target = $region16
      $region15: #{tpu_custom_call.1} parent=5 // pred_region
        // Predicated region
        $region17: #{tpu_custom_call.1} parent=15 // pred_check
          %p108 = pneg %p31
        $region18: #{tpu_custom_call.1} parent=15 // pred_check_branch
          %110 = sbr.rel (%p108) target = $region20
        $region19: #{tpu_custom_call.1} parent=15 // pred_region
          %p111 = scmp.lt.s32.totalorder %s11, 1
          %s112 = scalar_select %p111, %s11, 1
          %s113 = smul.addr %s112, 8
          %s114 = scalar_lea.vmem %s0, %s113
        $region20: #{tpu_custom_call.1} parent=15 // pred_fallthru
          _
        // Predicated region
        $region21: #{tpu_custom_call.1} parent=15 // pred_check
          %p115 = pneg %p57
        $region22: #{tpu_custom_call.1} parent=15 // pred_check_branch
          %117 = sbr.rel (%p115) target = $region24
        $region23: #{tpu_custom_call.1} parent=15 // pred_region
          %p118 = scmp.lt.s32.totalorder %s11, 1
          %s119 = scalar_select %p118, %s11, 1
          %s120 = smul.addr %s119, 8
          %s121 = scalar_lea.vmem %s1, %s120
        $region24: #{tpu_custom_call.1} parent=15 // pred_fallthru
          _
      $region16: #{tpu_custom_call.1} parent=5 // pred_fallthru
        _
      %p122 = scmp.le.s32.totalorder 1, %s11
      %p123 = scmp.lt.s32.totalorder %s11, 3
      %p124 = pnand %p122, %p123
      %p125 = pneg %p124
      // Predicated region
      $region25: #{tpu_custom_call.1} parent=5 // pred_check
        _
      $region26: #{tpu_custom_call.1} parent=5 // pred_check_branch
        %127 = sbr.rel (%p124) target = $region28
      $region27: #{tpu_custom_call.1} parent=5 // pred_region
        %s128 = ssub.s32 %s11, 1
        %p129 = scmp.lt.s32.totalorder %s16, 1
        %s130 = scalar_select %p129, %s16, 1
        %s131 = smul.addr %s130, 8
        %s132 = scalar_lea.vmem %s0, %s131
        %p133 = pneg %p37
        %p134 = pneg %p34
        %p135 = scmp.lt.s32.totalorder %s16, 1
        %s136 = scalar_select %p135, %s16, 1
        %s137 = smul.addr %s136, 8
        %s138 = scalar_lea.vmem %s1, %s137
        %p139 = pneg %p63
        %p140 = pneg %p60
        %p141 = pneg %p89
        %p142 = pneg %p86
        %s143 = sand.u32 %s76, 1
        %s144 = scalar_lea.sflag [#allocation3], %s143
        %s145 = sand.u32 %s76, 1
        %s146 = smul.addr %s145, 8
        %s147 = scalar_lea.vmem [#allocation2], %s146
        %p148 = scmp.lt.s32.totalorder %s16, 1
        %s149 = scalar_select %p148, %s16, 1
        %s150 = smul.addr %s149, 8
        %s151 = scalar_lea.vmem %s0, %s150
        %p152 = scmp.lt.s32.totalorder %s16, 1
        %s153 = scalar_select %p152, %s16, 1
        %s154 = smul.addr %s153, 8
        %s155 = scalar_lea.vmem %s1, %s154
        %v156 = vld [vmem:[%s155] sm:$0xff]
        %v157 = vld [vmem:[%s151] sm:$0xff]
        %159 = vset.pattern.permute.xlu0 0
        %160 = vperm.xlu0 %159, %v157
        %v161 = vpop.permute.xlu0 %160
        %v163 = vmul.f32 %v156, %v161
        %164 = vst [vmem:[%s147] sm:$0xff] %v163
        %s165 = sand.u32 %s76, 1
        %s166 = scalar_lea.sflag [#allocation3], %s165
        %s167 = sand.u32 %s76, 1
        %s168 = smul.addr %s167, 8
        %s169 = scalar_lea.vmem [#allocation2], %s168
        // Predicated region
        $region29: #{tpu_custom_call.1} parent=27 // pred_check
          %p170 = pneg %p86
        $region30: #{tpu_custom_call.1} parent=27 // pred_check_branch
          %172 = sbr.rel (%p170) target = $region32
        $region31: #{tpu_custom_call.1} parent=27 // pred_region
          %s174 = ssub.s32 128, 128
          %175 = vsyncadd %s166, %s174
          %s176 = smul.addr %s16, 128
          %s177 = scalar_lea.hbm %s2, %s176
          %s179 = sshll.u32 %s169, 4
          %s180 = int_to_ptr.vmem [resolvable:$true] %s179
          %182 = dma.vmem_to_hbm [thread:$0]  %s180, 128, %s177, %s166
        $region32: #{tpu_custom_call.1} parent=27 // pred_fallthru
          _
      $region28: #{tpu_custom_call.1} parent=5 // pred_fallthru
        _
      %p183 = scmp.le.s32.totalorder 2, %s11
      // Predicated region
      $region33: #{tpu_custom_call.1} parent=5 // pred_check
        %p184 = pneg %p183
      $region34: #{tpu_custom_call.1} parent=5 // pred_check_branch
        %186 = sbr.rel (%p184) target = $region36
      $region35: #{tpu_custom_call.1} parent=5 // pred_region
        %s187 = ssub.s32 %s11, 2
        // Predicated region
        $region37: #{tpu_custom_call.1} parent=35 // pred_check
          %p188 = pneg %p92
        $region38: #{tpu_custom_call.1} parent=35 // pred_check_branch
          %190 = sbr.rel (%p188) target = $region40
        $region39: #{tpu_custom_call.1} parent=35 // pred_region
          %s191 = sand.u32 %s77, 1
          %s192 = scalar_lea.sflag [#allocation3], %s191
          %s193 = sand.u32 %s77, 1
          %s194 = smul.addr %s193, 8
          %s195 = scalar_lea.vmem [#allocation2], %s194
          %196 = dma.done %s192, 128
        $region40: #{tpu_custom_call.1} parent=35 // pred_fallthru
          _
      $region36: #{tpu_custom_call.1} parent=5 // pred_fallthru
        _
    $region6: #{tpu_custom_call.1} parent=1 // loop_footer
      %s15 = sadd.s32 1, %s11
    $region7: #{tpu_custom_call.1} parent=1 // loop_footer_branch
      %10 = sbr.rel target = $region3
    $region8: #{tpu_custom_call.1} parent=1 // loop_exit
      _
    %197 = vsyncpa [#allocation3], 1
    %s198 = scalar_lea.sflag [#allocation3], 1
    %199 = vsyncpa %s198, 1

</llo_original>
